<compile_context>
chip_gen: v7x
topology: tpu7x:2x2x1
jax: 0.10.0
libtpu: 0.0.40
codegen_flags: <defaults>
</compile_context>

<pallas_src>
import functools

import jax
import jax.numpy as jnp
from jax.experimental import pallas as pl
from jax.experimental.pallas import tpu as pltpu


# Above this many total copies, switch from unrolled Python loops to dynamic
# pl.loop issue (keeps the Mosaic program and compile time bounded).
_UNROLL_LIMIT = 32


def _a2a_dma_kernel(x_ref, o_ref, sems, *, world_size, splits):
    """All-to-all chunk exchange done entirely with coalesced HBM->HBM DMAs.

    x_ref, o_ref: (W, W, C, D) refs in HBM (memory_space=pl.ANY)
    sems:         (W, splits) DMA semaphores
    out[r, j] = x[j, r]   -- realized as, per receiver r, one (or `splits`)
    strided copies  x[:, r] -> out[r].
    """
    W = world_size
    S = splits
    sub = W // S  # senders moved per sub-copy (whole (C, D) chunks each)

    if W * S <= _UNROLL_LIMIT:
        # Small W: unrolled issue of all copies up-front so every DMA is in
        # flight concurrently, then block on completion.
        copies = []
        for r in range(W):          # receiver rank
            for s in range(S):      # sub-copy along the sender axis
                j0 = s * sub
                cp = pltpu.make_async_copy(
                    x_ref.at[pl.ds(j0, sub), r],      # strided source
                    o_ref.at[r, pl.ds(j0, sub)],      # contiguous dest
                    sems.at[r, s],
                )
                cp.start()
                copies.append(cp)
        for cp in copies:
            cp.wait()
    else:
        # Large W (splits == 1 in this regime): dynamic loops keep
        # scalar-core descriptor-issue code size O(1).
        @pl.loop(0, W)
        def _start(r):
            pltpu.make_async_copy(
                x_ref.at[:, r], o_ref.at[r], sems.at[r, 0]
            ).start()

        @pl.loop(0, W)
        def _wait(r):
            pltpu.make_async_copy(
                x_ref.at[:, r], o_ref.at[r], sems.at[r, 0]
            ).wait()


def all_to_all_single_sim(x_all: jax.Array, *, target_inflight: int = 8) -> jax.Array:
    """Simulated dist.all_to_all_single (no split sizes) over stacked ranks.

    x_all:   [W, N, D]  -- per-rank inputs stacked along axis 0 (N % W == 0)
    returns: [W, N, D]  -- per-rank outputs stacked along axis 0
    """
    W, N, D = x_all.shape
    assert N % W == 0, "all_to_all_single with no splits needs N % world_size == 0"
    C = N // W
    itemsize = jnp.dtype(x_all.dtype).itemsize

    # If W is below the number of DMA queues, split each per-receiver copy
    # along the sender axis (power-of-two) so ~target_inflight large DMAs are
    # concurrently in flight; never split inside a (C, D) chunk.
    splits = 1
    while (W * splits < target_inflight
           and splits * 2 <= W
           and W % (splits * 2) == 0):
        splits *= 2

    # View as [sender_rank, chunk_id, C, D]; the collective is a swap of the
    # first two axes, performed by the DMA engines (reshape is metadata-only).
    x4 = x_all.reshape(W, W, C, D)

    out4 = pl.pallas_call(
        functools.partial(_a2a_dma_kernel, world_size=W, splits=splits),
        out_shape=jax.ShapeDtypeStruct((W, W, C, D), x_all.dtype),
        in_specs=[pl.BlockSpec(memory_space=pl.ANY)],   # raw HBM ref, no auto-DMA
        out_specs=pl.BlockSpec(memory_space=pl.ANY),    # written only via manual DMA
        scratch_shapes=[pltpu.SemaphoreType.DMA((W, splits))],
        compiler_params=pltpu.CompilerParams(has_side_effects=True),
        # Pure memory traffic: read + write the whole tensor once each.
        cost_estimate=pl.CostEstimate(
            flops=0,
            transcendentals=0,
            bytes_accessed=2 * W * N * D * itemsize,
        ),
    )(x4)

    return out4.reshape(W, N, D)


if __name__ == "__main__":
    W = 4          # simulated world size
    N = 8          # rows of input1 per rank
    D = 128        # feature dim (lane-aligned)

    key = jax.random.PRNGKey(0)
    # input1 on each rank is [N, D]; stack all ranks -> [W, N, D]
    x_all = jax.random.normal(key, (W, N, D), dtype=jnp.float32)

    out_all = jax.block_until_ready(all_to_all_single_sim(x_all))

    # Pure-JAX reference: all_to_all_single == swap (sender, chunk) axes.
    C = N // W
    ref = jnp.swapaxes(x_all.reshape(W, W, C, D), 0, 1).reshape(W, N, D)

    assert out_all.shape == (W, N, D)
    assert out_all.dtype == x_all.dtype
    assert jnp.array_equal(out_all, ref), "all_to_all_single mismatch"

    print("KERNEL_OK")
</pallas_src>

<mosaic_0001>
module attributes {stable_mosaic.version = 11 : i64} {
  func.func @_a2a_dma_kernel(%arg0: memref<4x4x2x128xf32, #tpu.memory_space<any>>, %arg1: memref<4x4x2x128xf32, #tpu.memory_space<any>>, %arg2: memref<4x2x!tpu.dma_semaphore, #tpu.memory_space<semaphore_mem>>) attributes {dimension_semantics = [], scalar_prefetch = 0 : i64, scratch_operands = 1 : i64, tpu.core_type = #tpu.core_type<tc>} {
    %c0_i32 = arith.constant 0 : i32
    %c0_i32_0 = arith.constant 0 : i32
    %c0_i32_1 = arith.constant 0 : i32
    %c0_i32_2 = arith.constant 0 : i32
    %c0_i32_3 = arith.constant 0 : i32
    %c0_i32_4 = arith.constant 0 : i32
    %c0_i32_5 = arith.constant 0 : i32
    %0 = tpu.memref_slice %arg0[%c0_i32_3, %c0_i32, %c0_i32_4, %c0_i32_5] : memref<4x4x2x128xf32, #tpu.memory_space<any>> -> memref<2x1x2x128xf32, #tpu.memory_space<any>>
    %1 = tpu.memref_squeeze %0 : memref<2x1x2x128xf32, #tpu.memory_space<any>> -> memref<2x2x128xf32, #tpu.memory_space<any>>
    %c0_i32_6 = arith.constant 0 : i32
    %c0_i32_7 = arith.constant 0 : i32
    %c0_i32_8 = arith.constant 0 : i32
    %2 = tpu.memref_slice %arg1[%c0_i32_0, %c0_i32_6, %c0_i32_7, %c0_i32_8] : memref<4x4x2x128xf32, #tpu.memory_space<any>> -> memref<1x2x2x128xf32, #tpu.memory_space<any>>
    %3 = tpu.memref_squeeze %2 : memref<1x2x2x128xf32, #tpu.memory_space<any>> -> memref<2x2x128xf32, #tpu.memory_space<any>>
    %4 = tpu.memref_slice %arg2[%c0_i32_1, %c0_i32_2] : memref<4x2x!tpu.dma_semaphore, #tpu.memory_space<semaphore_mem>> -> memref<1x1x!tpu.dma_semaphore, #tpu.memory_space<semaphore_mem>>
    %5 = tpu.memref_squeeze %4 : memref<1x1x!tpu.dma_semaphore, #tpu.memory_space<semaphore_mem>> -> memref<!tpu.dma_semaphore, #tpu.memory_space<semaphore_mem>>
    tpu.enqueue_dma source(%1 : memref<2x2x128xf32, #tpu.memory_space<any>>) target(%3 : memref<2x2x128xf32, #tpu.memory_space<any>>) target_semaphore(%5 : memref<!tpu.dma_semaphore, #tpu.memory_space<semaphore_mem>>)
    %c0_i32_9 = arith.constant 0 : i32
    %c0_i32_10 = arith.constant 0 : i32
    %c0_i32_11 = arith.constant 0 : i32
    %c1_i32 = arith.constant 1 : i32
    %c2_i32 = arith.constant 2 : i32
    %c0_i32_12 = arith.constant 0 : i32
    %c0_i32_13 = arith.constant 0 : i32
    %6 = tpu.memref_slice %arg0[%c2_i32, %c0_i32_9, %c0_i32_12, %c0_i32_13] : memref<4x4x2x128xf32, #tpu.memory_space<any>> -> memref<2x1x2x128xf32, #tpu.memory_space<any>>
    %7 = tpu.memref_squeeze %6 : memref<2x1x2x128xf32, #tpu.memory_space<any>> -> memref<2x2x128xf32, #tpu.memory_space<any>>
    %c2_i32_14 = arith.constant 2 : i32
    %c0_i32_15 = arith.constant 0 : i32
    %c0_i32_16 = arith.constant 0 : i32
    %8 = tpu.memref_slice %arg1[%c0_i32_10, %c2_i32_14, %c0_i32_15, %c0_i32_16] : memref<4x4x2x128xf32, #tpu.memory_space<any>> -> memref<1x2x2x128xf32, #tpu.memory_space<any>>
    %9 = tpu.memref_squeeze %8 : memref<1x2x2x128xf32, #tpu.memory_space<any>> -> memref<2x2x128xf32, #tpu.memory_space<any>>
    %10 = tpu.memref_slice %arg2[%c0_i32_11, %c1_i32] : memref<4x2x!tpu.dma_semaphore, #tpu.memory_space<semaphore_mem>> -> memref<1x1x!tpu.dma_semaphore, #tpu.memory_space<semaphore_mem>>
    %11 = tpu.memref_squeeze %10 : memref<1x1x!tpu.dma_semaphore, #tpu.memory_space<semaphore_mem>> -> memref<!tpu.dma_semaphore, #tpu.memory_space<semaphore_mem>>
    tpu.enqueue_dma source(%7 : memref<2x2x128xf32, #tpu.memory_space<any>>) target(%9 : memref<2x2x128xf32, #tpu.memory_space<any>>) target_semaphore(%11 : memref<!tpu.dma_semaphore, #tpu.memory_space<semaphore_mem>>)
    %c1_i32_17 = arith.constant 1 : i32
    %c1_i32_18 = arith.constant 1 : i32
    %c1_i32_19 = arith.constant 1 : i32
    %c0_i32_20 = arith.constant 0 : i32
    %c0_i32_21 = arith.constant 0 : i32
    %c0_i32_22 = arith.constant 0 : i32
    %c0_i32_23 = arith.constant 0 : i32
    %12 = tpu.memref_slice %arg0[%c0_i32_21, %c1_i32_17, %c0_i32_22, %c0_i32_23] : memref<4x4x2x128xf32, #tpu.memory_space<any>> -> memref<2x1x2x128xf32, #tpu.memory_space<any>>
    %13 = tpu.memref_squeeze %12 : memref<2x1x2x128xf32, #tpu.memory_space<any>> -> memref<2x2x128xf32, #tpu.memory_space<any>>
    %c0_i32_24 = arith.constant 0 : i32
    %c0_i32_25 = arith.constant 0 : i32
    %c0_i32_26 = arith.constant 0 : i32
    %14 = tpu.memref_slice %arg1[%c1_i32_18, %c0_i32_24, %c0_i32_25, %c0_i32_26] : memref<4x4x2x128xf32, #tpu.memory_space<any>> -> memref<1x2x2x128xf32, #tpu.memory_space<any>>
    %15 = tpu.memref_squeeze %14 : memref<1x2x2x128xf32, #tpu.memory_space<any>> -> memref<2x2x128xf32, #tpu.memory_space<any>>
    %16 = tpu.memref_slice %arg2[%c1_i32_19, %c0_i32_20] : memref<4x2x!tpu.dma_semaphore, #tpu.memory_space<semaphore_mem>> -> memref<1x1x!tpu.dma_semaphore, #tpu.memory_space<semaphore_mem>>
    %17 = tpu.memref_squeeze %16 : memref<1x1x!tpu.dma_semaphore, #tpu.memory_space<semaphore_mem>> -> memref<!tpu.dma_semaphore, #tpu.memory_space<semaphore_mem>>
    tpu.enqueue_dma source(%13 : memref<2x2x128xf32, #tpu.memory_space<any>>) target(%15 : memref<2x2x128xf32, #tpu.memory_space<any>>) target_semaphore(%17 : memref<!tpu.dma_semaphore, #tpu.memory_space<semaphore_mem>>)
    %c1_i32_27 = arith.constant 1 : i32
    %c1_i32_28 = arith.constant 1 : i32
    %c1_i32_29 = arith.constant 1 : i32
    %c1_i32_30 = arith.constant 1 : i32
    %c2_i32_31 = arith.constant 2 : i32
    %c0_i32_32 = arith.constant 0 : i32
    %c0_i32_33 = arith.constant 0 : i32
    %18 = tpu.memref_slice %arg0[%c2_i32_31, %c1_i32_27, %c0_i32_32, %c0_i32_33] : memref<4x4x2x128xf32, #tpu.memory_space<any>> -> memref<2x1x2x128xf32, #tpu.memory_space<any>>
    %19 = tpu.memref_squeeze %18 : memref<2x1x2x128xf32, #tpu.memory_space<any>> -> memref<2x2x128xf32, #tpu.memory_space<any>>
    %c2_i32_34 = arith.constant 2 : i32
    %c0_i32_35 = arith.constant 0 : i32
    %c0_i32_36 = arith.constant 0 : i32
    %20 = tpu.memref_slice %arg1[%c1_i32_28, %c2_i32_34, %c0_i32_35, %c0_i32_36] : memref<4x4x2x128xf32, #tpu.memory_space<any>> -> memref<1x2x2x128xf32, #tpu.memory_space<any>>
    %21 = tpu.memref_squeeze %20 : memref<1x2x2x128xf32, #tpu.memory_space<any>> -> memref<2x2x128xf32, #tpu.memory_space<any>>
    %22 = tpu.memref_slice %arg2[%c1_i32_29, %c1_i32_30] : memref<4x2x!tpu.dma_semaphore, #tpu.memory_space<semaphore_mem>> -> memref<1x1x!tpu.dma_semaphore, #tpu.memory_space<semaphore_mem>>
    %23 = tpu.memref_squeeze %22 : memref<1x1x!tpu.dma_semaphore, #tpu.memory_space<semaphore_mem>> -> memref<!tpu.dma_semaphore, #tpu.memory_space<semaphore_mem>>
    tpu.enqueue_dma source(%19 : memref<2x2x128xf32, #tpu.memory_space<any>>) target(%21 : memref<2x2x128xf32, #tpu.memory_space<any>>) target_semaphore(%23 : memref<!tpu.dma_semaphore, #tpu.memory_space<semaphore_mem>>)
    %c2_i32_37 = arith.constant 2 : i32
    %c2_i32_38 = arith.constant 2 : i32
    %c2_i32_39 = arith.constant 2 : i32
    %c0_i32_40 = arith.constant 0 : i32
    %c0_i32_41 = arith.constant 0 : i32
    %c0_i32_42 = arith.constant 0 : i32
    %c0_i32_43 = arith.constant 0 : i32
    %24 = tpu.memref_slice %arg0[%c0_i32_41, %c2_i32_37, %c0_i32_42, %c0_i32_43] : memref<4x4x2x128xf32, #tpu.memory_space<any>> -> memref<2x1x2x128xf32, #tpu.memory_space<any>>
    %25 = tpu.memref_squeeze %24 : memref<2x1x2x128xf32, #tpu.memory_space<any>> -> memref<2x2x128xf32, #tpu.memory_space<any>>
    %c0_i32_44 = arith.constant 0 : i32
    %c0_i32_45 = arith.constant 0 : i32
    %c0_i32_46 = arith.constant 0 : i32
    %26 = tpu.memref_slice %arg1[%c2_i32_38, %c0_i32_44, %c0_i32_45, %c0_i32_46] : memref<4x4x2x128xf32, #tpu.memory_space<any>> -> memref<1x2x2x128xf32, #tpu.memory_space<any>>
    %27 = tpu.memref_squeeze %26 : memref<1x2x2x128xf32, #tpu.memory_space<any>> -> memref<2x2x128xf32, #tpu.memory_space<any>>
    %28 = tpu.memref_slice %arg2[%c2_i32_39, %c0_i32_40] : memref<4x2x!tpu.dma_semaphore, #tpu.memory_space<semaphore_mem>> -> memref<1x1x!tpu.dma_semaphore, #tpu.memory_space<semaphore_mem>>
    %29 = tpu.memref_squeeze %28 : memref<1x1x!tpu.dma_semaphore, #tpu.memory_space<semaphore_mem>> -> memref<!tpu.dma_semaphore, #tpu.memory_space<semaphore_mem>>
    tpu.enqueue_dma source(%25 : memref<2x2x128xf32, #tpu.memory_space<any>>) target(%27 : memref<2x2x128xf32, #tpu.memory_space<any>>) target_semaphore(%29 : memref<!tpu.dma_semaphore, #tpu.memory_space<semaphore_mem>>)
    %c2_i32_47 = arith.constant 2 : i32
    %c2_i32_48 = arith.constant 2 : i32
    %c2_i32_49 = arith.constant 2 : i32
    %c1_i32_50 = arith.constant 1 : i32
    %c2_i32_51 = arith.constant 2 : i32
    %c0_i32_52 = arith.constant 0 : i32
    %c0_i32_53 = arith.constant 0 : i32
    %30 = tpu.memref_slice %arg0[%c2_i32_51, %c2_i32_47, %c0_i32_52, %c0_i32_53] : memref<4x4x2x128xf32, #tpu.memory_space<any>> -> memref<2x1x2x128xf32, #tpu.memory_space<any>>
    %31 = tpu.memref_squeeze %30 : memref<2x1x2x128xf32, #tpu.memory_space<any>> -> memref<2x2x128xf32, #tpu.memory_space<any>>
    %c2_i32_54 = arith.constant 2 : i32
    %c0_i32_55 = arith.constant 0 : i32
    %c0_i32_56 = arith.constant 0 : i32
    %32 = tpu.memref_slice %arg1[%c2_i32_48, %c2_i32_54, %c0_i32_55, %c0_i32_56] : memref<4x4x2x128xf32, #tpu.memory_space<any>> -> memref<1x2x2x128xf32, #tpu.memory_space<any>>
    %33 = tpu.memref_squeeze %32 : memref<1x2x2x128xf32, #tpu.memory_space<any>> -> memref<2x2x128xf32, #tpu.memory_space<any>>
    %34 = tpu.memref_slice %arg2[%c2_i32_49, %c1_i32_50] : memref<4x2x!tpu.dma_semaphore, #tpu.memory_space<semaphore_mem>> -> memref<1x1x!tpu.dma_semaphore, #tpu.memory_space<semaphore_mem>>
    %35 = tpu.memref_squeeze %34 : memref<1x1x!tpu.dma_semaphore, #tpu.memory_space<semaphore_mem>> -> memref<!tpu.dma_semaphore, #tpu.memory_space<semaphore_mem>>
    tpu.enqueue_dma source(%31 : memref<2x2x128xf32, #tpu.memory_space<any>>) target(%33 : memref<2x2x128xf32, #tpu.memory_space<any>>) target_semaphore(%35 : memref<!tpu.dma_semaphore, #tpu.memory_space<semaphore_mem>>)
    %c3_i32 = arith.constant 3 : i32
    %c3_i32_57 = arith.constant 3 : i32
    %c3_i32_58 = arith.constant 3 : i32
    %c0_i32_59 = arith.constant 0 : i32
    %c0_i32_60 = arith.constant 0 : i32
    %c0_i32_61 = arith.constant 0 : i32
    %c0_i32_62 = arith.constant 0 : i32
    %36 = tpu.memref_slice %arg0[%c0_i32_60, %c3_i32, %c0_i32_61, %c0_i32_62] : memref<4x4x2x128xf32, #tpu.memory_space<any>> -> memref<2x1x2x128xf32, #tpu.memory_space<any>>
    %37 = tpu.memref_squeeze %36 : memref<2x1x2x128xf32, #tpu.memory_space<any>> -> memref<2x2x128xf32, #tpu.memory_space<any>>
    %c0_i32_63 = arith.constant 0 : i32
    %c0_i32_64 = arith.constant 0 : i32
    %c0_i32_65 = arith.constant 0 : i32
    %38 = tpu.memref_slice %arg1[%c3_i32_57, %c0_i32_63, %c0_i32_64, %c0_i32_65] : memref<4x4x2x128xf32, #tpu.memory_space<any>> -> memref<1x2x2x128xf32, #tpu.memory_space<any>>
    %39 = tpu.memref_squeeze %38 : memref<1x2x2x128xf32, #tpu.memory_space<any>> -> memref<2x2x128xf32, #tpu.memory_space<any>>
    %40 = tpu.memref_slice %arg2[%c3_i32_58, %c0_i32_59] : memref<4x2x!tpu.dma_semaphore, #tpu.memory_space<semaphore_mem>> -> memref<1x1x!tpu.dma_semaphore, #tpu.memory_space<semaphore_mem>>
    %41 = tpu.memref_squeeze %40 : memref<1x1x!tpu.dma_semaphore, #tpu.memory_space<semaphore_mem>> -> memref<!tpu.dma_semaphore, #tpu.memory_space<semaphore_mem>>
    tpu.enqueue_dma source(%37 : memref<2x2x128xf32, #tpu.memory_space<any>>) target(%39 : memref<2x2x128xf32, #tpu.memory_space<any>>) target_semaphore(%41 : memref<!tpu.dma_semaphore, #tpu.memory_space<semaphore_mem>>)
    %c3_i32_66 = arith.constant 3 : i32
    %c3_i32_67 = arith.constant 3 : i32
    %c3_i32_68 = arith.constant 3 : i32
    %c1_i32_69 = arith.constant 1 : i32
    %c2_i32_70 = arith.constant 2 : i32
    %c0_i32_71 = arith.constant 0 : i32
    %c0_i32_72 = arith.constant 0 : i32
    %42 = tpu.memref_slice %arg0[%c2_i32_70, %c3_i32_66, %c0_i32_71, %c0_i32_72] : memref<4x4x2x128xf32, #tpu.memory_space<any>> -> memref<2x1x2x128xf32, #tpu.memory_space<any>>
    %43 = tpu.memref_squeeze %42 : memref<2x1x2x128xf32, #tpu.memory_space<any>> -> memref<2x2x128xf32, #tpu.memory_space<any>>
    %c2_i32_73 = arith.constant 2 : i32
    %c0_i32_74 = arith.constant 0 : i32
    %c0_i32_75 = arith.constant 0 : i32
    %44 = tpu.memref_slice %arg1[%c3_i32_67, %c2_i32_73, %c0_i32_74, %c0_i32_75] : memref<4x4x2x128xf32, #tpu.memory_space<any>> -> memref<1x2x2x128xf32, #tpu.memory_space<any>>
    %45 = tpu.memref_squeeze %44 : memref<1x2x2x128xf32, #tpu.memory_space<any>> -> memref<2x2x128xf32, #tpu.memory_space<any>>
    %46 = tpu.memref_slice %arg2[%c3_i32_68, %c1_i32_69] : memref<4x2x!tpu.dma_semaphore, #tpu.memory_space<semaphore_mem>> -> memref<1x1x!tpu.dma_semaphore, #tpu.memory_space<semaphore_mem>>
    %47 = tpu.memref_squeeze %46 : memref<1x1x!tpu.dma_semaphore, #tpu.memory_space<semaphore_mem>> -> memref<!tpu.dma_semaphore, #tpu.memory_space<semaphore_mem>>
    tpu.enqueue_dma source(%43 : memref<2x2x128xf32, #tpu.memory_space<any>>) target(%45 : memref<2x2x128xf32, #tpu.memory_space<any>>) target_semaphore(%47 : memref<!tpu.dma_semaphore, #tpu.memory_space<semaphore_mem>>)
    %c0_i32_76 = arith.constant 0 : i32
    %c0_i32_77 = arith.constant 0 : i32
    %c0_i32_78 = arith.constant 0 : i32
    %c0_i32_79 = arith.constant 0 : i32
    %c0_i32_80 = arith.constant 0 : i32
    %c0_i32_81 = arith.constant 0 : i32
    %c0_i32_82 = arith.constant 0 : i32
    %48 = tpu.memref_slice %arg0[%c0_i32_80, %c0_i32_76, %c0_i32_81, %c0_i32_82] : memref<4x4x2x128xf32, #tpu.memory_space<any>> -> memref<2x1x2x128xf32, #tpu.memory_space<any>>
    %49 = tpu.memref_squeeze %48 : memref<2x1x2x128xf32, #tpu.memory_space<any>> -> memref<2x2x128xf32, #tpu.memory_space<any>>
    %c0_i32_83 = arith.constant 0 : i32
    %c0_i32_84 = arith.constant 0 : i32
    %c0_i32_85 = arith.constant 0 : i32
    %50 = tpu.memref_slice %arg1[%c0_i32_77, %c0_i32_83, %c0_i32_84, %c0_i32_85] : memref<4x4x2x128xf32, #tpu.memory_space<any>> -> memref<1x2x2x128xf32, #tpu.memory_space<any>>
    %51 = tpu.memref_squeeze %50 : memref<1x2x2x128xf32, #tpu.memory_space<any>> -> memref<2x2x128xf32, #tpu.memory_space<any>>
    %52 = tpu.memref_slice %arg2[%c0_i32_78, %c0_i32_79] : memref<4x2x!tpu.dma_semaphore, #tpu.memory_space<semaphore_mem>> -> memref<1x1x!tpu.dma_semaphore, #tpu.memory_space<semaphore_mem>>
    %53 = tpu.memref_squeeze %52 : memref<1x1x!tpu.dma_semaphore, #tpu.memory_space<semaphore_mem>> -> memref<!tpu.dma_semaphore, #tpu.memory_space<semaphore_mem>>
    tpu.wait_dma2 semaphore(%53 : memref<!tpu.dma_semaphore, #tpu.memory_space<semaphore_mem>>) src(%49 : memref<2x2x128xf32, #tpu.memory_space<any>>) dst(%51 : memref<2x2x128xf32, #tpu.memory_space<any>>)
    %c0_i32_86 = arith.constant 0 : i32
    %c0_i32_87 = arith.constant 0 : i32
    %c0_i32_88 = arith.constant 0 : i32
    %c1_i32_89 = arith.constant 1 : i32
    %c2_i32_90 = arith.constant 2 : i32
    %c0_i32_91 = arith.constant 0 : i32
    %c0_i32_92 = arith.constant 0 : i32
    %54 = tpu.memref_slice %arg0[%c2_i32_90, %c0_i32_86, %c0_i32_91, %c0_i32_92] : memref<4x4x2x128xf32, #tpu.memory_space<any>> -> memref<2x1x2x128xf32, #tpu.memory_space<any>>
    %55 = tpu.memref_squeeze %54 : memref<2x1x2x128xf32, #tpu.memory_space<any>> -> memref<2x2x128xf32, #tpu.memory_space<any>>
    %c2_i32_93 = arith.constant 2 : i32
    %c0_i32_94 = arith.constant 0 : i32
    %c0_i32_95 = arith.constant 0 : i32
    %56 = tpu.memref_slice %arg1[%c0_i32_87, %c2_i32_93, %c0_i32_94, %c0_i32_95] : memref<4x4x2x128xf32, #tpu.memory_space<any>> -> memref<1x2x2x128xf32, #tpu.memory_space<any>>
    %57 = tpu.memref_squeeze %56 : memref<1x2x2x128xf32, #tpu.memory_space<any>> -> memref<2x2x128xf32, #tpu.memory_space<any>>
    %58 = tpu.memref_slice %arg2[%c0_i32_88, %c1_i32_89] : memref<4x2x!tpu.dma_semaphore, #tpu.memory_space<semaphore_mem>> -> memref<1x1x!tpu.dma_semaphore, #tpu.memory_space<semaphore_mem>>
    %59 = tpu.memref_squeeze %58 : memref<1x1x!tpu.dma_semaphore, #tpu.memory_space<semaphore_mem>> -> memref<!tpu.dma_semaphore, #tpu.memory_space<semaphore_mem>>
    tpu.wait_dma2 semaphore(%59 : memref<!tpu.dma_semaphore, #tpu.memory_space<semaphore_mem>>) src(%55 : memref<2x2x128xf32, #tpu.memory_space<any>>) dst(%57 : memref<2x2x128xf32, #tpu.memory_space<any>>)
    %c1_i32_96 = arith.constant 1 : i32
    %c1_i32_97 = arith.constant 1 : i32
    %c1_i32_98 = arith.constant 1 : i32
    %c0_i32_99 = arith.constant 0 : i32
    %c0_i32_100 = arith.constant 0 : i32
    %c0_i32_101 = arith.constant 0 : i32
    %c0_i32_102 = arith.constant 0 : i32
    %60 = tpu.memref_slice %arg0[%c0_i32_100, %c1_i32_96, %c0_i32_101, %c0_i32_102] : memref<4x4x2x128xf32, #tpu.memory_space<any>> -> memref<2x1x2x128xf32, #tpu.memory_space<any>>
    %61 = tpu.memref_squeeze %60 : memref<2x1x2x128xf32, #tpu.memory_space<any>> -> memref<2x2x128xf32, #tpu.memory_space<any>>
    %c0_i32_103 = arith.constant 0 : i32
    %c0_i32_104 = arith.constant 0 : i32
    %c0_i32_105 = arith.constant 0 : i32
    %62 = tpu.memref_slice %arg1[%c1_i32_97, %c0_i32_103, %c0_i32_104, %c0_i32_105] : memref<4x4x2x128xf32, #tpu.memory_space<any>> -> memref<1x2x2x128xf32, #tpu.memory_space<any>>
    %63 = tpu.memref_squeeze %62 : memref<1x2x2x128xf32, #tpu.memory_space<any>> -> memref<2x2x128xf32, #tpu.memory_space<any>>
    %64 = tpu.memref_slice %arg2[%c1_i32_98, %c0_i32_99] : memref<4x2x!tpu.dma_semaphore, #tpu.memory_space<semaphore_mem>> -> memref<1x1x!tpu.dma_semaphore, #tpu.memory_space<semaphore_mem>>
    %65 = tpu.memref_squeeze %64 : memref<1x1x!tpu.dma_semaphore, #tpu.memory_space<semaphore_mem>> -> memref<!tpu.dma_semaphore, #tpu.memory_space<semaphore_mem>>
    tpu.wait_dma2 semaphore(%65 : memref<!tpu.dma_semaphore, #tpu.memory_space<semaphore_mem>>) src(%61 : memref<2x2x128xf32, #tpu.memory_space<any>>) dst(%63 : memref<2x2x128xf32, #tpu.memory_space<any>>)
    %c1_i32_106 = arith.constant 1 : i32
    %c1_i32_107 = arith.constant 1 : i32
    %c1_i32_108 = arith.constant 1 : i32
    %c1_i32_109 = arith.constant 1 : i32
    %c2_i32_110 = arith.constant 2 : i32
    %c0_i32_111 = arith.constant 0 : i32
    %c0_i32_112 = arith.constant 0 : i32
    %66 = tpu.memref_slice %arg0[%c2_i32_110, %c1_i32_106, %c0_i32_111, %c0_i32_112] : memref<4x4x2x128xf32, #tpu.memory_space<any>> -> memref<2x1x2x128xf32, #tpu.memory_space<any>>
    %67 = tpu.memref_squeeze %66 : memref<2x1x2x128xf32, #tpu.memory_space<any>> -> memref<2x2x128xf32, #tpu.memory_space<any>>
    %c2_i32_113 = arith.constant 2 : i32
    %c0_i32_114 = arith.constant 0 : i32
    %c0_i32_115 = arith.constant 0 : i32
    %68 = tpu.memref_slice %arg1[%c1_i32_107, %c2_i32_113, %c0_i32_114, %c0_i32_115] : memref<4x4x2x128xf32, #tpu.memory_space<any>> -> memref<1x2x2x128xf32, #tpu.memory_space<any>>
    %69 = tpu.memref_squeeze %68 : memref<1x2x2x128xf32, #tpu.memory_space<any>> -> memref<2x2x128xf32, #tpu.memory_space<any>>
    %70 = tpu.memref_slice %arg2[%c1_i32_108, %c1_i32_109] : memref<4x2x!tpu.dma_semaphore, #tpu.memory_space<semaphore_mem>> -> memref<1x1x!tpu.dma_semaphore, #tpu.memory_space<semaphore_mem>>
    %71 = tpu.memref_squeeze %70 : memref<1x1x!tpu.dma_semaphore, #tpu.memory_space<semaphore_mem>> -> memref<!tpu.dma_semaphore, #tpu.memory_space<semaphore_mem>>
    tpu.wait_dma2 semaphore(%71 : memref<!tpu.dma_semaphore, #tpu.memory_space<semaphore_mem>>) src(%67 : memref<2x2x128xf32, #tpu.memory_space<any>>) dst(%69 : memref<2x2x128xf32, #tpu.memory_space<any>>)
    %c2_i32_116 = arith.constant 2 : i32
    %c2_i32_117 = arith.constant 2 : i32
    %c2_i32_118 = arith.constant 2 : i32
    %c0_i32_119 = arith.constant 0 : i32
    %c0_i32_120 = arith.constant 0 : i32
    %c0_i32_121 = arith.constant 0 : i32
    %c0_i32_122 = arith.constant 0 : i32
    %72 = tpu.memref_slice %arg0[%c0_i32_120, %c2_i32_116, %c0_i32_121, %c0_i32_122] : memref<4x4x2x128xf32, #tpu.memory_space<any>> -> memref<2x1x2x128xf32, #tpu.memory_space<any>>
    %73 = tpu.memref_squeeze %72 : memref<2x1x2x128xf32, #tpu.memory_space<any>> -> memref<2x2x128xf32, #tpu.memory_space<any>>
    %c0_i32_123 = arith.constant 0 : i32
    %c0_i32_124 = arith.constant 0 : i32
    %c0_i32_125 = arith.constant 0 : i32
    %74 = tpu.memref_slice %arg1[%c2_i32_117, %c0_i32_123, %c0_i32_124, %c0_i32_125] : memref<4x4x2x128xf32, #tpu.memory_space<any>> -> memref<1x2x2x128xf32, #tpu.memory_space<any>>
    %75 = tpu.memref_squeeze %74 : memref<1x2x2x128xf32, #tpu.memory_space<any>> -> memref<2x2x128xf32, #tpu.memory_space<any>>
    %76 = tpu.memref_slice %arg2[%c2_i32_118, %c0_i32_119] : memref<4x2x!tpu.dma_semaphore, #tpu.memory_space<semaphore_mem>> -> memref<1x1x!tpu.dma_semaphore, #tpu.memory_space<semaphore_mem>>
    %77 = tpu.memref_squeeze %76 : memref<1x1x!tpu.dma_semaphore, #tpu.memory_space<semaphore_mem>> -> memref<!tpu.dma_semaphore, #tpu.memory_space<semaphore_mem>>
    tpu.wait_dma2 semaphore(%77 : memref<!tpu.dma_semaphore, #tpu.memory_space<semaphore_mem>>) src(%73 : memref<2x2x128xf32, #tpu.memory_space<any>>) dst(%75 : memref<2x2x128xf32, #tpu.memory_space<any>>)
    %c2_i32_126 = arith.constant 2 : i32
    %c2_i32_127 = arith.constant 2 : i32
    %c2_i32_128 = arith.constant 2 : i32
    %c1_i32_129 = arith.constant 1 : i32
    %c2_i32_130 = arith.constant 2 : i32
    %c0_i32_131 = arith.constant 0 : i32
    %c0_i32_132 = arith.constant 0 : i32
    %78 = tpu.memref_slice %arg0[%c2_i32_130, %c2_i32_126, %c0_i32_131, %c0_i32_132] : memref<4x4x2x128xf32, #tpu.memory_space<any>> -> memref<2x1x2x128xf32, #tpu.memory_space<any>>
    %79 = tpu.memref_squeeze %78 : memref<2x1x2x128xf32, #tpu.memory_space<any>> -> memref<2x2x128xf32, #tpu.memory_space<any>>
    %c2_i32_133 = arith.constant 2 : i32
    %c0_i32_134 = arith.constant 0 : i32
    %c0_i32_135 = arith.constant 0 : i32
    %80 = tpu.memref_slice %arg1[%c2_i32_127, %c2_i32_133, %c0_i32_134, %c0_i32_135] : memref<4x4x2x128xf32, #tpu.memory_space<any>> -> memref<1x2x2x128xf32, #tpu.memory_space<any>>
    %81 = tpu.memref_squeeze %80 : memref<1x2x2x128xf32, #tpu.memory_space<any>> -> memref<2x2x128xf32, #tpu.memory_space<any>>
    %82 = tpu.memref_slice %arg2[%c2_i32_128, %c1_i32_129] : memref<4x2x!tpu.dma_semaphore, #tpu.memory_space<semaphore_mem>> -> memref<1x1x!tpu.dma_semaphore, #tpu.memory_space<semaphore_mem>>
    %83 = tpu.memref_squeeze %82 : memref<1x1x!tpu.dma_semaphore, #tpu.memory_space<semaphore_mem>> -> memref<!tpu.dma_semaphore, #tpu.memory_space<semaphore_mem>>
    tpu.wait_dma2 semaphore(%83 : memref<!tpu.dma_semaphore, #tpu.memory_space<semaphore_mem>>) src(%79 : memref<2x2x128xf32, #tpu.memory_space<any>>) dst(%81 : memref<2x2x128xf32, #tpu.memory_space<any>>)
    %c3_i32_136 = arith.constant 3 : i32
    %c3_i32_137 = arith.constant 3 : i32
    %c3_i32_138 = arith.constant 3 : i32
    %c0_i32_139 = arith.constant 0 : i32
    %c0_i32_140 = arith.constant 0 : i32
    %c0_i32_141 = arith.constant 0 : i32
    %c0_i32_142 = arith.constant 0 : i32
    %84 = tpu.memref_slice %arg0[%c0_i32_140, %c3_i32_136, %c0_i32_141, %c0_i32_142] : memref<4x4x2x128xf32, #tpu.memory_space<any>> -> memref<2x1x2x128xf32, #tpu.memory_space<any>>
    %85 = tpu.memref_squeeze %84 : memref<2x1x2x128xf32, #tpu.memory_space<any>> -> memref<2x2x128xf32, #tpu.memory_space<any>>
    %c0_i32_143 = arith.constant 0 : i32
    %c0_i32_144 = arith.constant 0 : i32
    %c0_i32_145 = arith.constant 0 : i32
    %86 = tpu.memref_slice %arg1[%c3_i32_137, %c0_i32_143, %c0_i32_144, %c0_i32_145] : memref<4x4x2x128xf32, #tpu.memory_space<any>> -> memref<1x2x2x128xf32, #tpu.memory_space<any>>
    %87 = tpu.memref_squeeze %86 : memref<1x2x2x128xf32, #tpu.memory_space<any>> -> memref<2x2x128xf32, #tpu.memory_space<any>>
    %88 = tpu.memref_slice %arg2[%c3_i32_138, %c0_i32_139] : memref<4x2x!tpu.dma_semaphore, #tpu.memory_space<semaphore_mem>> -> memref<1x1x!tpu.dma_semaphore, #tpu.memory_space<semaphore_mem>>
    %89 = tpu.memref_squeeze %88 : memref<1x1x!tpu.dma_semaphore, #tpu.memory_space<semaphore_mem>> -> memref<!tpu.dma_semaphore, #tpu.memory_space<semaphore_mem>>
    tpu.wait_dma2 semaphore(%89 : memref<!tpu.dma_semaphore, #tpu.memory_space<semaphore_mem>>) src(%85 : memref<2x2x128xf32, #tpu.memory_space<any>>) dst(%87 : memref<2x2x128xf32, #tpu.memory_space<any>>)
    %c3_i32_146 = arith.constant 3 : i32
    %c3_i32_147 = arith.constant 3 : i32
    %c3_i32_148 = arith.constant 3 : i32
    %c1_i32_149 = arith.constant 1 : i32
    %c2_i32_150 = arith.constant 2 : i32
    %c0_i32_151 = arith.constant 0 : i32
    %c0_i32_152 = arith.constant 0 : i32
    %90 = tpu.memref_slice %arg0[%c2_i32_150, %c3_i32_146, %c0_i32_151, %c0_i32_152] : memref<4x4x2x128xf32, #tpu.memory_space<any>> -> memref<2x1x2x128xf32, #tpu.memory_space<any>>
    %91 = tpu.memref_squeeze %90 : memref<2x1x2x128xf32, #tpu.memory_space<any>> -> memref<2x2x128xf32, #tpu.memory_space<any>>
    %c2_i32_153 = arith.constant 2 : i32
    %c0_i32_154 = arith.constant 0 : i32
    %c0_i32_155 = arith.constant 0 : i32
    %92 = tpu.memref_slice %arg1[%c3_i32_147, %c2_i32_153, %c0_i32_154, %c0_i32_155] : memref<4x4x2x128xf32, #tpu.memory_space<any>> -> memref<1x2x2x128xf32, #tpu.memory_space<any>>
    %93 = tpu.memref_squeeze %92 : memref<1x2x2x128xf32, #tpu.memory_space<any>> -> memref<2x2x128xf32, #tpu.memory_space<any>>
    %94 = tpu.memref_slice %arg2[%c3_i32_148, %c1_i32_149] : memref<4x2x!tpu.dma_semaphore, #tpu.memory_space<semaphore_mem>> -> memref<1x1x!tpu.dma_semaphore, #tpu.memory_space<semaphore_mem>>
    %95 = tpu.memref_squeeze %94 : memref<1x1x!tpu.dma_semaphore, #tpu.memory_space<semaphore_mem>> -> memref<!tpu.dma_semaphore, #tpu.memory_space<semaphore_mem>>
    tpu.wait_dma2 semaphore(%95 : memref<!tpu.dma_semaphore, #tpu.memory_space<semaphore_mem>>) src(%91 : memref<2x2x128xf32, #tpu.memory_space<any>>) dst(%93 : memref<2x2x128xf32, #tpu.memory_space<any>>)
    return
  }
}

</mosaic_0001>

<llo_original>
// kernel: tpu_custom_call.1
$region0: #{tpu_custom_call.1}
  #allocation0 [shape = 'u32[]', space=smem, size = 0x4, offset = 0x4, fixed_abs, tag = 'smem constant byte address 0x4 - core index']
  #allocation1 [shape = 'u32[144,128]{1,0:T(1,128)}', space=vmem, size = 0x12000, scoped, tag = 'internal scratch']
  #allocation2 [shape = 's32[8]{0}', space=sflag, size = 0x20, scoped, tag = 'scratch operand']
  #allocation3 [shape = 's32[]', space=sflag, size = 0x4, offset = 0, fixed_abs, tag = 'sflag constant byte address 0x0 - dummy sync flag']
  #allocation5 [shape = 's32[]', space=sflag, size = 0x4, offset = 0, fixed_abs, tag = 'sflag constant byte address 0x0 - dummy sync flag']
  #allocation7 [shape = 's32[]', space=sflag, size = 0x4, offset = 0, fixed_abs, tag = 'sflag constant byte address 0x0 - dummy sync flag']
  #allocation9 [shape = 's32[]', space=sflag, size = 0x4, offset = 0, fixed_abs, tag = 'sflag constant byte address 0x0 - dummy sync flag']
  #allocation11 [shape = 's32[]', space=sflag, size = 0x4, offset = 0, fixed_abs, tag = 'sflag constant byte address 0x0 - dummy sync flag']
  #allocation13 [shape = 's32[]', space=sflag, size = 0x4, offset = 0, fixed_abs, tag = 'sflag constant byte address 0x0 - dummy sync flag']
  #allocation15 [shape = 's32[]', space=sflag, size = 0x4, offset = 0, fixed_abs, tag = 'sflag constant byte address 0x0 - dummy sync flag']
  #allocation17 [shape = 's32[]', space=sflag, size = 0x4, offset = 0, fixed_abs, tag = 'sflag constant byte address 0x0 - dummy sync flag']
  %s0 = inlined_call_operand.hbm [shape: f32[4,4,2,128], index: 0, kind: input, shape index: {}]
  %s1 = inlined_call_operand.hbm [shape: f32[4,4,2,128], index: 1, kind: output, shape index: {}]
  %s2 = sld [smem:[#allocation0]]
  $region2: #{tpu_custom_call.1} parent=0
    _
  %s4 = ssub.s32 1, %s2
  %s5 = scalar_select 0, %s4, %s2
  $region1: #{tpu_custom_call.1} parent=0
    #allocation4 [shape = 'u32[3]{0}', space=smem, size = 0xc, scoped, tag = 'DMA stride descriptor']
    #allocation6 [shape = 'u32[3]{0}', space=smem, size = 0xc, scoped, tag = 'DMA stride descriptor']
    #allocation8 [shape = 'u32[3]{0}', space=smem, size = 0xc, scoped, tag = 'DMA stride descriptor']
    #allocation10 [shape = 'u32[3]{0}', space=smem, size = 0xc, scoped, tag = 'DMA stride descriptor']
    #allocation12 [shape = 'u32[3]{0}', space=smem, size = 0xc, scoped, tag = 'DMA stride descriptor']
    #allocation14 [shape = 'u32[3]{0}', space=smem, size = 0xc, scoped, tag = 'DMA stride descriptor']
    #allocation16 [shape = 'u32[3]{0}', space=smem, size = 0xc, scoped, tag = 'DMA stride descriptor']
    #allocation18 [shape = 'u32[3]{0}', space=smem, size = 0xc, scoped, tag = 'DMA stride descriptor']
    %s7 = sshll.u32 1, 14
    %s8 = sxor.u32 4294967295, %s7
    %s11 = sshll.u32 3, 24
    %s12 = sxor.u32 4294967295, %s11
    %s13 = sand.u32 0, %s12
    %s15 = sor.u32 %s13, 0
    %18 = sst [smem:[#allocation4]] 128
    %s19 = scalar_lea.smem [#allocation4], 1
    %20 = sst [smem:[%s19]] 32
    %s21 = scalar_lea.smem [#allocation4], 2
    %22 = sst [smem:[%s21]] 2
    %24 = dma.general %s0, 64, %s1, [#allocation2], [#allocation3], [#allocation4], %s15, 0
    %s25 = scalar_lea.hbm %s0, 256
    %s26 = scalar_lea.hbm %s1, 64
    %s27 = scalar_lea.sflag [#allocation2], 1
    %s29 = sshll.u32 1, 14
    %s30 = sxor.u32 4294967295, %s29
    %s33 = sshll.u32 3, 24
    %s34 = sxor.u32 4294967295, %s33
    %s35 = sand.u32 0, %s34
    %s37 = sor.u32 %s35, 0
    %40 = sst [smem:[#allocation6]] 128
    %s41 = scalar_lea.smem [#allocation6], 1
    %42 = sst [smem:[%s41]] 32
    %s43 = scalar_lea.smem [#allocation6], 2
    %44 = sst [smem:[%s43]] 2
    %46 = dma.general %s25, 64, %s26, %s27, [#allocation5], [#allocation6], %s37, 0
    %s47 = scalar_lea.hbm %s0, 32
    %s48 = scalar_lea.hbm %s1, 128
    %s49 = scalar_lea.sflag [#allocation2], 2
    %s51 = sshll.u32 1, 14
    %s52 = sxor.u32 4294967295, %s51
    %s55 = sshll.u32 3, 24
    %s56 = sxor.u32 4294967295, %s55
    %s57 = sand.u32 0, %s56
    %s59 = sor.u32 %s57, 0
    %62 = sst [smem:[#allocation8]] 128
    %s63 = scalar_lea.smem [#allocation8], 1
    %64 = sst [smem:[%s63]] 32
    %s65 = scalar_lea.smem [#allocation8], 2
    %66 = sst [smem:[%s65]] 2
    %68 = dma.general %s47, 64, %s48, %s49, [#allocation7], [#allocation8], %s59, 0
    %s69 = scalar_lea.hbm %s0, 288
    %s70 = scalar_lea.hbm %s1, 192
    %s71 = scalar_lea.sflag [#allocation2], 3
    %s73 = sshll.u32 1, 14
    %s74 = sxor.u32 4294967295, %s73
    %s77 = sshll.u32 3, 24
    %s78 = sxor.u32 4294967295, %s77
    %s79 = sand.u32 0, %s78
    %s81 = sor.u32 %s79, 0
    %84 = sst [smem:[#allocation10]] 128
    %s85 = scalar_lea.smem [#allocation10], 1
    %86 = sst [smem:[%s85]] 32
    %s87 = scalar_lea.smem [#allocation10], 2
    %88 = sst [smem:[%s87]] 2
    %90 = dma.general %s69, 64, %s70, %s71, [#allocation9], [#allocation10], %s81, 0
    %s91 = scalar_lea.hbm %s0, 64
    %s92 = scalar_lea.hbm %s1, 256
    %s93 = scalar_lea.sflag [#allocation2], 4
    %s95 = sshll.u32 1, 14
    %s96 = sxor.u32 4294967295, %s95
    %s99 = sshll.u32 3, 24
    %s100 = sxor.u32 4294967295, %s99
    %s101 = sand.u32 0, %s100
    %s103 = sor.u32 %s101, 0
    %106 = sst [smem:[#allocation12]] 128
    %s107 = scalar_lea.smem [#allocation12], 1
    %108 = sst [smem:[%s107]] 32
    %s109 = scalar_lea.smem [#allocation12], 2
    %110 = sst [smem:[%s109]] 2
    %112 = dma.general %s91, 64, %s92, %s93, [#allocation11], [#allocation12], %s103, 0
    %s113 = scalar_lea.hbm %s0, 320
    %s114 = scalar_lea.hbm %s1, 320
    %s115 = scalar_lea.sflag [#allocation2], 5
    %s117 = sshll.u32 1, 14
    %s118 = sxor.u32 4294967295, %s117
    %s121 = sshll.u32 3, 24
    %s122 = sxor.u32 4294967295, %s121
    %s123 = sand.u32 0, %s122
    %s125 = sor.u32 %s123, 0
    %128 = sst [smem:[#allocation14]] 128
    %s129 = scalar_lea.smem [#allocation14], 1
    %130 = sst [smem:[%s129]] 32
    %s131 = scalar_lea.smem [#allocation14], 2
    %132 = sst [smem:[%s131]] 2
    %134 = dma.general %s113, 64, %s114, %s115, [#allocation13], [#allocation14], %s125, 0
    %s135 = scalar_lea.hbm %s0, 96
    %s136 = scalar_lea.hbm %s1, 384
    %s137 = scalar_lea.sflag [#allocation2], 6
    %s139 = sshll.u32 1, 14
    %s140 = sxor.u32 4294967295, %s139
    %s143 = sshll.u32 3, 24
    %s144 = sxor.u32 4294967295, %s143
    %s145 = sand.u32 0, %s144
    %s147 = sor.u32 %s145, 0
    %150 = sst [smem:[#allocation16]] 128
    %s151 = scalar_lea.smem [#allocation16], 1
    %152 = sst [smem:[%s151]] 32
    %s153 = scalar_lea.smem [#allocation16], 2
    %154 = sst [smem:[%s153]] 2
    %156 = dma.general %s135, 64, %s136, %s137, [#allocation15], [#allocation16], %s147, 0
    %s157 = scalar_lea.hbm %s0, 352
    %s158 = scalar_lea.hbm %s1, 448
    %s159 = scalar_lea.sflag [#allocation2], 7
    %s161 = sshll.u32 1, 14
    %s162 = sxor.u32 4294967295, %s161
    %s165 = sshll.u32 3, 24
    %s166 = sxor.u32 4294967295, %s165
    %s167 = sand.u32 0, %s166
    %s169 = sor.u32 %s167, 0
    %172 = sst [smem:[#allocation18]] 128
    %s173 = scalar_lea.smem [#allocation18], 1
    %174 = sst [smem:[%s173]] 32
    %s175 = scalar_lea.smem [#allocation18], 2
    %176 = sst [smem:[%s175]] 2
    %178 = dma.general %s157, 64, %s158, %s159, [#allocation17], [#allocation18], %s169, 0
    %s179 = smul.u32 2, 2
    %s180 = smul.u32 %s179, 1
    %s181 = sshll.u32 %s180, 4
    %182 = dma.done [#allocation2], %s181
    %s183 = sshll.u32 %s180, 4
    %184 = dma.done %s27, %s183
    %s185 = sshll.u32 %s180, 4
    %186 = dma.done %s49, %s185
    %s187 = sshll.u32 %s180, 4
    %188 = dma.done %s71, %s187
    %s189 = sshll.u32 %s180, 4
    %190 = dma.done %s93, %s189
    %s191 = sshll.u32 %s180, 4
    %192 = dma.done %s115, %s191
    %s193 = sshll.u32 %s180, 4
    %194 = dma.done %s137, %s193
    %s195 = sshll.u32 %s180, 4
    %196 = dma.done %s159, %s195
  %197 = vsyncmov [#allocation2]
  %s198 = vpop.sfrf %197
  %p199 = scmp.eq.s32.totalorder %s198, 0
  %p200 = pneg %p199
  %202 = shalt.err (%p200)
  %s203 = scalar_lea.sflag [#allocation2], 1
  %204 = vsyncmov %s203
  %s205 = vpop.sfrf %204
  %p206 = scmp.eq.s32.totalorder %s205, 0
  %p207 = pneg %p206
  %209 = shalt.err (%p207)
  %s210 = scalar_lea.sflag [#allocation2], 2
  %211 = vsyncmov %s210
  %s212 = vpop.sfrf %211
  %p213 = scmp.eq.s32.totalorder %s212, 0
  %p214 = pneg %p213
  %216 = shalt.err (%p214)
  %s217 = scalar_lea.sflag [#allocation2], 3
  %218 = vsyncmov %s217
  %s219 = vpop.sfrf %218
  %p220 = scmp.eq.s32.totalorder %s219, 0
  %p221 = pneg %p220
  %223 = shalt.err (%p221)
  %s224 = scalar_lea.sflag [#allocation2], 4
  %225 = vsyncmov %s224
  %s226 = vpop.sfrf %225
  %p227 = scmp.eq.s32.totalorder %s226, 0
  %p228 = pneg %p227
  %230 = shalt.err (%p228)
  %s231 = scalar_lea.sflag [#allocation2], 5
  %232 = vsyncmov %s231
  %s233 = vpop.sfrf %232
  %p234 = scmp.eq.s32.totalorder %s233, 0
  %p235 = pneg %p234
  %237 = shalt.err (%p235)
  %s238 = scalar_lea.sflag [#allocation2], 6
  %239 = vsyncmov %s238
  %s240 = vpop.sfrf %239
  %p241 = scmp.eq.s32.totalorder %s240, 0
  %p242 = pneg %p241
  %244 = shalt.err (%p242)
  %s245 = scalar_lea.sflag [#allocation2], 7
  %246 = vsyncmov %s245
  %s247 = vpop.sfrf %246
  %p248 = scmp.eq.s32.totalorder %s247, 0
  %p249 = pneg %p248
  %251 = shalt.err (%p249)

</llo_original>
